<compile_context>
chip_gen: v6e
topology: v6e:2x2x1
jax: 0.10.0
libtpu: 0.0.40
codegen_flags: <defaults>
</compile_context>

<pallas_src>
import jax
import jax.numpy as jnp
import numpy as np
from jax.experimental import pallas as pl
from jax.experimental.pallas import tpu as pltpu


def _round_up(v, m):
    return (v + m - 1) // m * m


def _vmem_limit_bytes():
    """Generation-aware VMEM limit: 7/8 of physical, capped at 112 MiB."""
    try:
        phys = int(pltpu.get_tpu_info().vmem_capacity_bytes)
    except Exception:
        phys = 64 * 1024 * 1024
    return max(32 * 1024 * 1024, min((phys * 7) // 8, 112 * 1024 * 1024))


# ------------------------------------------------------------------ kernel ---

def _make_fused_kernel(n_layers):
    """Fused kernel: n_layers ChebConv(K=3)+LeakyReLU, then pool+BN+FC head.

    Ref order: S_hbm, Xt, (W_l, b_l) * n_layers, Pt, bn_scale_p, bn_shift_p,
               fc_W1t, cond_bias_t, out, [scratch: S_vmem, S_sem].
    S is DMA'd into VMEM exactly once and stays resident across every layer;
    activations never leave VMEM.
    """

    def kernel(*refs):
        s_hbm, x_ref = refs[0], refs[1]
        conv_refs = refs[2:2 + 2 * n_layers]
        (pt_ref, sp_ref, sh_ref, w1t_ref, cb_ref,
         o_ref, s_vmem, s_sem) = refs[2 + 2 * n_layers:]

        # Single-buffered HBM->VMEM copy of S (never double-buffered).
        # TODO(synk): split in halves + overlap with layer-0 compute for large N.
        cp = pltpu.make_async_copy(s_hbm, s_vmem, s_sem)
        cp.start()
        cp.wait()
        S = s_vmem[...]                     # (Np, Np) bf16, resident all layers

        h = x_ref[...]                      # (C0p, Np) f32, transposed features

        for l in range(n_layers):           # unrolled at trace time
            w_ref = conv_refs[2 * l]        # (3, Hp, Cp) bf16 (per-order stack)
            b_ref = conv_refs[2 * l + 1]    # (Hp, 1)     f32

            t0b = h.astype(jnp.bfloat16)                                 # (Cp, Np)
            t1 = jnp.dot(t0b, S, preferred_element_type=jnp.float32)    # T1^T = T0^T S (S symmetric)
            t1b = t1.astype(jnp.bfloat16)
            t2 = 2.0 * jnp.dot(t1b, S, preferred_element_type=jnp.float32) - h
            t2b = t2.astype(jnp.bfloat16)
            # Three dots against static leading-axis slices of the stacked
            # weight (free views) -> no (3Cp, Np) staging buffer.
            pre = (jnp.dot(w_ref[0], t0b, preferred_element_type=jnp.float32)
                   + jnp.dot(w_ref[1], t1b, preferred_element_type=jnp.float32)
                   + jnp.dot(w_ref[2], t2b, preferred_element_type=jnp.float32)
                   + b_ref[...])
            h = jnp.maximum(pre, 0.2 * pre)          # LeakyReLU(0.2), f32 epilogue

        # ---- head: global_add_pool + folded BN affine + Linear (pooled part) --
        pooled = jnp.dot(h.astype(jnp.bfloat16), pt_ref[...],
                         preferred_element_type=jnp.float32)            # (Hp, B)
        n_pool = pooled * sp_ref[...] + sh_ref[...]                      # BN affine
        # cond branch + fc bias were pre-folded into cb_ref (L, B) outside.
        o_ref[...] = (jnp.dot(w1t_ref[...], n_pool,
                              preferred_element_type=jnp.float32)
                      + cb_ref[...])                                     # (L, B)

    return kernel


# ------------------------------------------------------------------ wrapper --

_VMEM = pl.BlockSpec(memory_space=pltpu.MemorySpace.VMEM)
_ANY = pl.BlockSpec(memory_space=pl.ANY)


@jax.jit
def cheb_encoder_forward(params, x, S_bf16, Pt_bf16, cond):
    """x: (N, C0) f32, S_bf16: (Np, Np) bf16, Pt_bf16: (Np, B) bf16, cond: (B, 7)."""
    n_layers = len(params["convs"])
    N, C0 = x.shape
    Np = S_bf16.shape[0]
    C0p = params["convs"][0][0].shape[2]               # padded input feature dim
    L = params["fc_w1t"].shape[0]
    B = cond.shape[0]

    # cond branch of the head, folded with the fc bias in plain JAX (tiny).
    cond_bias = ((cond * params["bn_scale_c"] + params["bn_shift_c"])
                 @ params["fc_w2"] + params["fc_b"])                  # (B, L)
    cond_bias_t = cond_bias.T                                         # (L, B)

    # Transposed + zero-padded node features: (C0p, Np), f32 (lane-dense nodes).
    xt = jnp.zeros((C0p, Np), jnp.float32).at[:C0, :N].set(x.T)

    inputs = [S_bf16, xt]
    for (w, b) in params["convs"]:
        inputs += [w, b]
    inputs += [Pt_bf16, params["bn_scale_p"], params["bn_shift_p"],
               params["fc_w1t"], cond_bias_t]

    out_t = pl.pallas_call(
        _make_fused_kernel(n_layers),
        out_shape=jax.ShapeDtypeStruct((L, B), jnp.float32),
        in_specs=[_ANY] + [_VMEM] * (len(inputs) - 1),   # S stays in HBM, copied once
        out_specs=_VMEM,
        scratch_shapes=[pltpu.VMEM((Np, Np), jnp.bfloat16),
                        pltpu.SemaphoreType.DMA(())],
        compiler_params=pltpu.CompilerParams(vmem_limit_bytes=_vmem_limit_bytes()),
    )(*inputs)
    return out_t.T                                                    # (B, L)


# ------------------------------------------------------------------ glue -----

def build_prop_matrix(edge_index, num_nodes, num_nodes_padded, dtype=jnp.bfloat16):
    """Dense L_hat = -D^{-1/2} A D^{-1/2} (ChebConv, sym norm, lambda_max=2),
    zero-padded to (Np, Np).  Padded nodes have degree 0 => zero rows & cols,
    so padded-node garbage never leaks into real nodes.
    Note: duplicate edges would not be accumulated here (demo graph has none)."""
    A = np.zeros((num_nodes_padded, num_nodes_padded), dtype=np.float32)
    src, dst = edge_index
    A[src, dst] = 1.0
    A[dst, src] = 1.0          # treat edges as undirected
    deg = A.sum(axis=1)
    d_inv_sqrt = np.where(deg > 0, 1.0 / np.sqrt(np.maximum(deg, 1e-12)), 0.0)
    S = -(d_inv_sqrt[:, None] * A * d_inv_sqrt[None, :])
    return jnp.asarray(S, dtype=dtype)


def build_pool_matrix_t(batch, num_graphs, num_nodes_padded):
    """Transposed one-hot (Np, B) matrix: pooled^T = X^T @ Pt (padded rows zero)."""
    n_real = batch.shape[0]
    Pt = np.zeros((num_nodes_padded, num_graphs), dtype=np.float32)
    Pt[np.arange(n_real), batch] = 1.0
    return jnp.asarray(Pt, dtype=jnp.bfloat16)     # 0/1 values, exact in bf16


def init_params(key, input_dim, hidden_dim, latent_dim, n_layers, K=3):
    """Synthetic parameters mirroring the module's shapes, pre-laid-out for the
    fused transposed-layout kernel (per-order (3,Hp,Cp) weight stack, 16-aligned
    feature padding for bf16 sublane packing)."""
    assert K == 3
    params = {"convs": []}
    dims = [input_dim] + [hidden_dim] * n_layers
    for layer in range(n_layers):
        cin, cout = dims[layer], dims[layer + 1]
        cin_p, cout_p = _round_up(cin, 16), _round_up(cout, 16)
        key, kw, kb = jax.random.split(key, 3)
        glorot = np.sqrt(6.0 / (cin + cout))
        W = np.asarray(jax.random.uniform(kw, (K, cin, cout), jnp.float32,
                                          -glorot, glorot))
        b = np.asarray(jax.random.uniform(kb, (1, cout), jnp.float32, -0.1, 0.1))
        # Stacked + transposed weight: Wt[k, o, c] = W[k, c, o]; zero pad so
        # padded channels contribute exactly zero.
        Wt = np.zeros((K, cout_p, cin_p), np.float32)
        for k in range(K):
            Wt[k, :cout, :cin] = W[k].T
        bt = np.zeros((cout_p, 1), np.float32)
        bt[:cout, 0] = b[0]
        params["convs"].append((jnp.asarray(Wt, jnp.bfloat16),
                                jnp.asarray(bt, jnp.float32)))

    feat = hidden_dim + 7
    Hp = _round_up(hidden_dim, 16)
    # BatchNorm1d defaults (eval): weight=1, bias=0, running_mean=0, running_var=1.
    gamma = np.ones((feat,), np.float32)
    beta = np.zeros((feat,), np.float32)
    running_mean = np.zeros((feat,), np.float32)
    running_var = np.ones((feat,), np.float32)
    eps = 1e-5
    scale = gamma / np.sqrt(running_var + eps)
    shift = beta - running_mean * scale
    sp = np.zeros((Hp, 1), np.float32)
    sh = np.zeros((Hp, 1), np.float32)
    sp[:hidden_dim, 0] = scale[:hidden_dim]
    sh[:hidden_dim, 0] = shift[:hidden_dim]
    params["bn_scale_p"] = jnp.asarray(sp)
    params["bn_shift_p"] = jnp.asarray(sh)
    params["bn_scale_c"] = jnp.asarray(scale[hidden_dim:].reshape(1, 7))
    params["bn_shift_c"] = jnp.asarray(shift[hidden_dim:].reshape(1, 7))

    key, kw, kb = jax.random.split(key, 3)
    bound = 1.0 / np.sqrt(feat)
    W_fc = np.asarray(jax.random.uniform(kw, (latent_dim, feat), jnp.float32,
                                         -bound, bound))
    b_fc = np.asarray(jax.random.uniform(kb, (1, latent_dim), jnp.float32,
                                         -bound, bound))
    W1t = np.zeros((latent_dim, Hp), np.float32)
    W1t[:, :hidden_dim] = W_fc[:, :hidden_dim]          # (L, Hp) pooled part
    params["fc_w1t"] = jnp.asarray(W1t)
    params["fc_w2"] = jnp.asarray(W_fc[:, hidden_dim:].T)   # (7, L) cond part
    params["fc_b"] = jnp.asarray(b_fc)                       # (1, L)
    return params


def reference_forward(params, xt, S_bf16, Pt_bf16, cond):
    """Pure-JAX f32 reference mirroring the kernel math (for tolerance check)."""
    S = S_bf16.astype(jnp.float32)
    h = xt
    for (w, b) in params["convs"]:
        W = w.astype(jnp.float32)
        t0 = h
        t1 = t0 @ S
        t2 = 2.0 * (t1 @ S) - t0
        pre = W[0] @ t0 + W[1] @ t1 + W[2] @ t2 + b
        h = jnp.maximum(pre, 0.2 * pre)
    pooled = h @ Pt_bf16.astype(jnp.float32)
    n_pool = pooled * params["bn_scale_p"] + params["bn_shift_p"]
    cond_bias = ((cond * params["bn_scale_c"] + params["bn_shift_c"])
                 @ params["fc_w2"] + params["fc_b"])
    out_t = params["fc_w1t"] @ n_pool + cond_bias.T
    return out_t.T


# ------------------------------------------------------------------ main -----

if __name__ == "__main__":
    input_dim, hidden_dim, latent_dim, n_layers, K = 4, 32, 8, 2, 3
    num_graphs, nodes_per_graph = 2, 8
    N = num_graphs * nodes_per_graph
    Np = _round_up(N, 128)                 # lane-dense node axis

    # Deterministic graph: a ring per graph plus one chord.
    src, dst = [], []
    for g in range(num_graphs):
        off = g * nodes_per_graph
        for i in range(nodes_per_graph):
            src.append(off + i)
            dst.append(off + (i + 1) % nodes_per_graph)
        src.append(off + 0)
        dst.append(off + nodes_per_graph // 2)
    edge_index = np.stack([np.array(src), np.array(dst)])          # (2, E)
    batch = np.repeat(np.arange(num_graphs), nodes_per_graph)      # (N,)

    key = jax.random.PRNGKey(0)
    key, kx, kc = jax.random.split(key, 3)
    x = jax.random.normal(kx, (N, input_dim), jnp.float32)         # data.x
    cond = jax.random.normal(kc, (num_graphs, 7), jnp.float32)     # data.stats

    S = build_prop_matrix(edge_index, N, Np)        # (Np, Np) bf16
    Pt = build_pool_matrix_t(batch, num_graphs, Np) # (Np, B)  bf16
    params = init_params(key, input_dim, hidden_dim, latent_dim, n_layers, K)

    out = cheb_encoder_forward(params, x, S, Pt, cond)
    out = jax.block_until_ready(out)
    assert out.shape == (num_graphs, latent_dim)
    assert bool(jnp.all(jnp.isfinite(out)))

    # Structural correctness check against the pure-JAX f32 reference
    # (difference is only the in-kernel bf16 activation casts).
    C0p = params["convs"][0][0].shape[2]
    xt = jnp.zeros((C0p, Np), jnp.float32).at[:input_dim, :N].set(x.T)
    ref = reference_forward(params, xt, S, Pt, cond)
    err = float(jnp.max(jnp.abs(out - ref)))
    scale = float(jnp.max(jnp.abs(ref)))
    assert err <= 0.1 + 0.02 * scale, f"max |err|={err} vs ref scale={scale}"

    print("KERNEL_OK")
</pallas_src>

<mosaic_0001>
module attributes {stable_mosaic.version = 11 : i64} {
  func.func @kernel(%arg0: memref<128x128xbf16, #tpu.memory_space<any>>, %arg1: memref<16x128xf32, #tpu.memory_space<vmem>>, %arg2: memref<3x32x16xbf16, #tpu.memory_space<vmem>>, %arg3: memref<32x1xf32, #tpu.memory_space<vmem>>, %arg4: memref<3x32x32xbf16, #tpu.memory_space<vmem>>, %arg5: memref<32x1xf32, #tpu.memory_space<vmem>>, %arg6: memref<128x2xbf16, #tpu.memory_space<vmem>>, %arg7: memref<32x1xf32, #tpu.memory_space<vmem>>, %arg8: memref<32x1xf32, #tpu.memory_space<vmem>>, %arg9: memref<8x32xf32, #tpu.memory_space<vmem>>, %arg10: memref<8x2xf32, #tpu.memory_space<vmem>>, %arg11: memref<8x2xf32, #tpu.memory_space<vmem>>, %arg12: memref<128x128xbf16, #tpu.memory_space<vmem>>, %arg13: memref<!tpu.dma_semaphore, #tpu.memory_space<semaphore_mem>>) attributes {dimension_semantics = [], scalar_prefetch = 0 : i64, scratch_operands = 2 : i64, tpu.core_type = #tpu.core_type<tc>} {
    tpu.enqueue_dma source(%arg0 : memref<128x128xbf16, #tpu.memory_space<any>>) target(%arg12 : memref<128x128xbf16, #tpu.memory_space<vmem>>) target_semaphore(%arg13 : memref<!tpu.dma_semaphore, #tpu.memory_space<semaphore_mem>>)
    tpu.wait_dma2 semaphore(%arg13 : memref<!tpu.dma_semaphore, #tpu.memory_space<semaphore_mem>>) src(%arg0 : memref<128x128xbf16, #tpu.memory_space<any>>) dst(%arg12 : memref<128x128xbf16, #tpu.memory_space<vmem>>)
    %c0 = arith.constant 0 : index
    %c0_0 = arith.constant 0 : index
    %0 = vector.load %arg12[%c0, %c0_0] : memref<128x128xbf16, #tpu.memory_space<vmem>>, vector<128x128xbf16>
    %c0_1 = arith.constant 0 : index
    %c0_2 = arith.constant 0 : index
    %1 = vector.load %arg1[%c0_1, %c0_2] : memref<16x128xf32, #tpu.memory_space<vmem>>, vector<16x128xf32>
    %2 = arith.truncf %1 : vector<16x128xf32> to vector<16x128xbf16>
    %cst = arith.constant dense<0.000000e+00> : vector<16x128xf32>
    %3 = tpu.matmul %2, %0, %cst {dimension_numbers = #tpu.dot_dimension_numbers<[1], [0], [0], [1], [0, 0, 1, 1], [], []>} : vector<16x128xbf16>, vector<128x128xbf16>, vector<16x128xf32> -> vector<16x128xf32>
    %4 = arith.truncf %3 : vector<16x128xf32> to vector<16x128xbf16>
    %cst_3 = arith.constant dense<0.000000e+00> : vector<16x128xf32>
    %5 = tpu.matmul %4, %0, %cst_3 {dimension_numbers = #tpu.dot_dimension_numbers<[1], [0], [0], [1], [0, 0, 1, 1], [], []>} : vector<16x128xbf16>, vector<128x128xbf16>, vector<16x128xf32> -> vector<16x128xf32>
    %cst_4 = arith.constant 2.000000e+00 : f32
    %6 = vector.broadcast %cst_4 : f32 to vector<16x128xf32>
    %7 = arith.mulf %6, %5 : vector<16x128xf32>
    %8 = arith.subf %7, %1 : vector<16x128xf32>
    %9 = arith.truncf %8 : vector<16x128xf32> to vector<16x128xbf16>
    %c0_5 = arith.constant 0 : index
    %c0_6 = arith.constant 0 : index
    %c0_7 = arith.constant 0 : index
    %10 = vector.load %arg2[%c0_5, %c0_6, %c0_7] : memref<3x32x16xbf16, #tpu.memory_space<vmem>>, vector<1x32x16xbf16>
    %11 = vector.shape_cast %10 : vector<1x32x16xbf16> to vector<32x16xbf16>
    %cst_8 = arith.constant dense<0.000000e+00> : vector<32x128xf32>
    %12 = tpu.matmul %11, %2, %cst_8 {dimension_numbers = #tpu.dot_dimension_numbers<[1], [0], [0], [1], [0, 0, 1, 1], [], []>} : vector<32x16xbf16>, vector<16x128xbf16>, vector<32x128xf32> -> vector<32x128xf32>
    %c1 = arith.constant 1 : index
    %c0_9 = arith.constant 0 : index
    %c0_10 = arith.constant 0 : index
    %13 = vector.load %arg2[%c1, %c0_9, %c0_10] : memref<3x32x16xbf16, #tpu.memory_space<vmem>>, vector<1x32x16xbf16>
    %14 = vector.shape_cast %13 : vector<1x32x16xbf16> to vector<32x16xbf16>
    %cst_11 = arith.constant dense<0.000000e+00> : vector<32x128xf32>
    %15 = tpu.matmul %14, %4, %cst_11 {dimension_numbers = #tpu.dot_dimension_numbers<[1], [0], [0], [1], [0, 0, 1, 1], [], []>} : vector<32x16xbf16>, vector<16x128xbf16>, vector<32x128xf32> -> vector<32x128xf32>
    %16 = arith.addf %12, %15 : vector<32x128xf32>
    %c2 = arith.constant 2 : index
    %c0_12 = arith.constant 0 : index
    %c0_13 = arith.constant 0 : index
    %17 = vector.load %arg2[%c2, %c0_12, %c0_13] : memref<3x32x16xbf16, #tpu.memory_space<vmem>>, vector<1x32x16xbf16>
    %18 = vector.shape_cast %17 : vector<1x32x16xbf16> to vector<32x16xbf16>
    %cst_14 = arith.constant dense<0.000000e+00> : vector<32x128xf32>
    %19 = tpu.matmul %18, %9, %cst_14 {dimension_numbers = #tpu.dot_dimension_numbers<[1], [0], [0], [1], [0, 0, 1, 1], [], []>} : vector<32x16xbf16>, vector<16x128xbf16>, vector<32x128xf32> -> vector<32x128xf32>
    %20 = arith.addf %16, %19 : vector<32x128xf32>
    %c0_15 = arith.constant 0 : index
    %c0_16 = arith.constant 0 : index
    %21 = vector.load %arg3[%c0_15, %c0_16] : memref<32x1xf32, #tpu.memory_space<vmem>>, vector<32x1xf32>
    %22 = vector.broadcast %21 : vector<32x1xf32> to vector<32x128xf32>
    %23 = arith.addf %20, %22 : vector<32x128xf32>
    %cst_17 = arith.constant 2.000000e-01 : f32
    %24 = vector.broadcast %cst_17 : f32 to vector<32x128xf32>
    %25 = arith.mulf %24, %23 : vector<32x128xf32>
    %26 = arith.maximumf %23, %25 : vector<32x128xf32>
    %27 = arith.truncf %26 : vector<32x128xf32> to vector<32x128xbf16>
    %cst_18 = arith.constant dense<0.000000e+00> : vector<32x128xf32>
    %28 = tpu.matmul %27, %0, %cst_18 {dimension_numbers = #tpu.dot_dimension_numbers<[1], [0], [0], [1], [0, 0, 1, 1], [], []>} : vector<32x128xbf16>, vector<128x128xbf16>, vector<32x128xf32> -> vector<32x128xf32>
    %29 = arith.truncf %28 : vector<32x128xf32> to vector<32x128xbf16>
    %cst_19 = arith.constant dense<0.000000e+00> : vector<32x128xf32>
    %30 = tpu.matmul %29, %0, %cst_19 {dimension_numbers = #tpu.dot_dimension_numbers<[1], [0], [0], [1], [0, 0, 1, 1], [], []>} : vector<32x128xbf16>, vector<128x128xbf16>, vector<32x128xf32> -> vector<32x128xf32>
    %cst_20 = arith.constant 2.000000e+00 : f32
    %31 = vector.broadcast %cst_20 : f32 to vector<32x128xf32>
    %32 = arith.mulf %31, %30 : vector<32x128xf32>
    %33 = arith.subf %32, %26 : vector<32x128xf32>
    %34 = arith.truncf %33 : vector<32x128xf32> to vector<32x128xbf16>
    %c0_21 = arith.constant 0 : index
    %c0_22 = arith.constant 0 : index
    %c0_23 = arith.constant 0 : index
    %35 = vector.load %arg4[%c0_21, %c0_22, %c0_23] : memref<3x32x32xbf16, #tpu.memory_space<vmem>>, vector<1x32x32xbf16>
    %36 = vector.shape_cast %35 : vector<1x32x32xbf16> to vector<32x32xbf16>
    %cst_24 = arith.constant dense<0.000000e+00> : vector<32x128xf32>
    %37 = tpu.matmul %36, %27, %cst_24 {dimension_numbers = #tpu.dot_dimension_numbers<[1], [0], [0], [1], [0, 0, 1, 1], [], []>} : vector<32x32xbf16>, vector<32x128xbf16>, vector<32x128xf32> -> vector<32x128xf32>
    %c1_25 = arith.constant 1 : index
    %c0_26 = arith.constant 0 : index
    %c0_27 = arith.constant 0 : index
    %38 = vector.load %arg4[%c1_25, %c0_26, %c0_27] : memref<3x32x32xbf16, #tpu.memory_space<vmem>>, vector<1x32x32xbf16>
    %39 = vector.shape_cast %38 : vector<1x32x32xbf16> to vector<32x32xbf16>
    %cst_28 = arith.constant dense<0.000000e+00> : vector<32x128xf32>
    %40 = tpu.matmul %39, %29, %cst_28 {dimension_numbers = #tpu.dot_dimension_numbers<[1], [0], [0], [1], [0, 0, 1, 1], [], []>} : vector<32x32xbf16>, vector<32x128xbf16>, vector<32x128xf32> -> vector<32x128xf32>
    %41 = arith.addf %37, %40 : vector<32x128xf32>
    %c2_29 = arith.constant 2 : index
    %c0_30 = arith.constant 0 : index
    %c0_31 = arith.constant 0 : index
    %42 = vector.load %arg4[%c2_29, %c0_30, %c0_31] : memref<3x32x32xbf16, #tpu.memory_space<vmem>>, vector<1x32x32xbf16>
    %43 = vector.shape_cast %42 : vector<1x32x32xbf16> to vector<32x32xbf16>
    %cst_32 = arith.constant dense<0.000000e+00> : vector<32x128xf32>
    %44 = tpu.matmul %43, %34, %cst_32 {dimension_numbers = #tpu.dot_dimension_numbers<[1], [0], [0], [1], [0, 0, 1, 1], [], []>} : vector<32x32xbf16>, vector<32x128xbf16>, vector<32x128xf32> -> vector<32x128xf32>
    %45 = arith.addf %41, %44 : vector<32x128xf32>
    %c0_33 = arith.constant 0 : index
    %c0_34 = arith.constant 0 : index
    %46 = vector.load %arg5[%c0_33, %c0_34] : memref<32x1xf32, #tpu.memory_space<vmem>>, vector<32x1xf32>
    %47 = vector.broadcast %46 : vector<32x1xf32> to vector<32x128xf32>
    %48 = arith.addf %45, %47 : vector<32x128xf32>
    %cst_35 = arith.constant 2.000000e-01 : f32
    %49 = vector.broadcast %cst_35 : f32 to vector<32x128xf32>
    %50 = arith.mulf %49, %48 : vector<32x128xf32>
    %51 = arith.maximumf %48, %50 : vector<32x128xf32>
    %52 = arith.truncf %51 : vector<32x128xf32> to vector<32x128xbf16>
    %c0_36 = arith.constant 0 : index
    %c0_37 = arith.constant 0 : index
    %53 = vector.load %arg6[%c0_36, %c0_37] : memref<128x2xbf16, #tpu.memory_space<vmem>>, vector<128x2xbf16>
    %cst_38 = arith.constant dense<0.000000e+00> : vector<32x2xf32>
    %54 = tpu.matmul %52, %53, %cst_38 {dimension_numbers = #tpu.dot_dimension_numbers<[1], [0], [0], [1], [0, 0, 1, 1], [], []>} : vector<32x128xbf16>, vector<128x2xbf16>, vector<32x2xf32> -> vector<32x2xf32>
    %c0_39 = arith.constant 0 : index
    %c0_40 = arith.constant 0 : index
    %55 = vector.load %arg7[%c0_39, %c0_40] : memref<32x1xf32, #tpu.memory_space<vmem>>, vector<32x1xf32>
    %56 = vector.broadcast %55 : vector<32x1xf32> to vector<32x2xf32>
    %57 = arith.mulf %54, %56 : vector<32x2xf32>
    %c0_41 = arith.constant 0 : index
    %c0_42 = arith.constant 0 : index
    %58 = vector.load %arg8[%c0_41, %c0_42] : memref<32x1xf32, #tpu.memory_space<vmem>>, vector<32x1xf32>
    %59 = vector.broadcast %58 : vector<32x1xf32> to vector<32x2xf32>
    %60 = arith.addf %57, %59 : vector<32x2xf32>
    %c0_43 = arith.constant 0 : index
    %c0_44 = arith.constant 0 : index
    %61 = vector.load %arg9[%c0_43, %c0_44] : memref<8x32xf32, #tpu.memory_space<vmem>>, vector<8x32xf32>
    %cst_45 = arith.constant dense<0.000000e+00> : vector<8x2xf32>
    %62 = tpu.matmul %61, %60, %cst_45 {dimension_numbers = #tpu.dot_dimension_numbers<[1], [0], [0], [1], [0, 0, 1, 1], [], []>} : vector<8x32xf32>, vector<32x2xf32>, vector<8x2xf32> -> vector<8x2xf32>
    %c0_46 = arith.constant 0 : index
    %c0_47 = arith.constant 0 : index
    %63 = vector.load %arg10[%c0_46, %c0_47] : memref<8x2xf32, #tpu.memory_space<vmem>>, vector<8x2xf32>
    %64 = arith.addf %62, %63 : vector<8x2xf32>
    %c0_48 = arith.constant 0 : index
    %c0_49 = arith.constant 0 : index
    %65 = vector.load %arg11[%c0_48, %c0_49] : memref<8x2xf32, #tpu.memory_space<vmem>>, vector<8x2xf32>
    tpu.vector_store %arg11[%c0_48, %c0_49], %64 {strides = array<i32>} : memref<8x2xf32, #tpu.memory_space<vmem>>, vector<8x2xf32>,
    return
  }
}

</mosaic_0001>

<llo_original>
// kernel: cheb_encoder_forward.1
$region0: #{cheb_encoder_forward.1}
  #allocation0 [shape = 'u32[]', space=smem, size = 0x4, offset = 0x4, fixed_abs, tag = 'smem constant byte address 0x4 - core index']
  #allocation1 [shape = 'u32[144,128]{1,0:T(1,128)}', space=vmem, size = 0x12000, scoped, tag = 'internal scratch']
  #allocation2 [shape = 'bf16[128,128]{1,0:T(8,128)(2,1)}', space=vmem, size = 0x8000, scoped, tag = 'scratch operand']
  #allocation3 [shape = 's32[1]{0}', space=sflag, size = 0x4, scoped, tag = 'scratch operand']
  #allocation4 [shape = 's32[]', space=sflag, size = 0x4, offset = 0, fixed_abs, tag = 'sflag constant byte address 0x0 - dummy sync flag']
  %s0 = inlined_call_operand.vmem [shape: bf16[128,128], index: 0, kind: input, shape index: {}]
  %s1 = inlined_call_operand.vmem [shape: f32[16,128], index: 1, kind: input, shape index: {}]
  %s2 = inlined_call_operand.vmem [shape: bf16[3,32,16], index: 2, kind: input, shape index: {}]
  %s3 = inlined_call_operand.vmem [shape: f32[32,1], index: 3, kind: input, shape index: {}]
  %s4 = inlined_call_operand.vmem [shape: bf16[3,32,32], index: 4, kind: input, shape index: {}]
  %s5 = inlined_call_operand.vmem [shape: f32[32,1], index: 5, kind: input, shape index: {}]
  %s6 = inlined_call_operand.vmem [shape: bf16[128,2], index: 6, kind: input, shape index: {}]
  %s7 = inlined_call_operand.vmem [shape: f32[32,1], index: 7, kind: input, shape index: {}]
  %s8 = inlined_call_operand.vmem [shape: f32[32,1], index: 8, kind: input, shape index: {}]
  %s9 = inlined_call_operand.vmem [shape: f32[8,32], index: 9, kind: input, shape index: {}]
  %s10 = inlined_call_operand.vmem [shape: f32[8,2], index: 10, kind: input, shape index: {}]
  %s11 = inlined_call_operand.vmem [shape: f32[8,2], index: 11, kind: output, shape index: {}]
  %s12 = sld [smem:[#allocation0]]
  $region84: #{cheb_encoder_forward.1} parent=0
    _
  %s14 = ssub.s32 1, %s12
  %s15 = scalar_select 0, %s14, %s12
  // Predicated region
  $region2: #{cheb_encoder_forward.1} parent=0 // pred_check
    _
  $region3: #{cheb_encoder_forward.1} parent=0 // pred_check_branch
    %17 = sbr.rel (0) target = $region5
  $region4: #{cheb_encoder_forward.1} parent=0 // pred_region
    _
  $region5: #{cheb_encoder_forward.1} parent=0 // pred_fallthru
    _
  // Predicated region
  $region6: #{cheb_encoder_forward.1} parent=0 // pred_check
    _
  $region7: #{cheb_encoder_forward.1} parent=0 // pred_check_branch
    %19 = sbr.rel (0) target = $region9
  $region8: #{cheb_encoder_forward.1} parent=0 // pred_region
    _
  $region9: #{cheb_encoder_forward.1} parent=0 // pred_fallthru
    _
  // Predicated region
  $region10: #{cheb_encoder_forward.1} parent=0 // pred_check
    _
  $region11: #{cheb_encoder_forward.1} parent=0 // pred_check_branch
    %21 = sbr.rel (0) target = $region13
  $region12: #{cheb_encoder_forward.1} parent=0 // pred_region
    _
  $region13: #{cheb_encoder_forward.1} parent=0 // pred_fallthru
    _
  // Predicated region
  $region14: #{cheb_encoder_forward.1} parent=0 // pred_check
    _
  $region15: #{cheb_encoder_forward.1} parent=0 // pred_check_branch
    %23 = sbr.rel (0) target = $region17
  $region16: #{cheb_encoder_forward.1} parent=0 // pred_region
    _
  $region17: #{cheb_encoder_forward.1} parent=0 // pred_fallthru
    _
  // Predicated region
  $region18: #{cheb_encoder_forward.1} parent=0 // pred_check
    _
  $region19: #{cheb_encoder_forward.1} parent=0 // pred_check_branch
    %25 = sbr.rel (0) target = $region21
  $region20: #{cheb_encoder_forward.1} parent=0 // pred_region
    _
  $region21: #{cheb_encoder_forward.1} parent=0 // pred_fallthru
    _
  // Predicated region
  $region22: #{cheb_encoder_forward.1} parent=0 // pred_check
    _
  $region23: #{cheb_encoder_forward.1} parent=0 // pred_check_branch
    %27 = sbr.rel (0) target = $region25
  $region24: #{cheb_encoder_forward.1} parent=0 // pred_region
    _
  $region25: #{cheb_encoder_forward.1} parent=0 // pred_fallthru
    _
  // Predicated region
  $region26: #{cheb_encoder_forward.1} parent=0 // pred_check
    _
  $region27: #{cheb_encoder_forward.1} parent=0 // pred_check_branch
    %29 = sbr.rel (0) target = $region29
  $region28: #{cheb_encoder_forward.1} parent=0 // pred_region
    _
  $region29: #{cheb_encoder_forward.1} parent=0 // pred_fallthru
    _
  // Predicated region
  $region30: #{cheb_encoder_forward.1} parent=0 // pred_check
    _
  $region31: #{cheb_encoder_forward.1} parent=0 // pred_check_branch
    %31 = sbr.rel (0) target = $region33
  $region32: #{cheb_encoder_forward.1} parent=0 // pred_region
    _
  $region33: #{cheb_encoder_forward.1} parent=0 // pred_fallthru
    _
  // Predicated region
  $region34: #{cheb_encoder_forward.1} parent=0 // pred_check
    _
  $region35: #{cheb_encoder_forward.1} parent=0 // pred_check_branch
    %33 = sbr.rel (0) target = $region37
  $region36: #{cheb_encoder_forward.1} parent=0 // pred_region
    _
  $region37: #{cheb_encoder_forward.1} parent=0 // pred_fallthru
    _
  // Predicated region
  $region38: #{cheb_encoder_forward.1} parent=0 // pred_check
    _
  $region39: #{cheb_encoder_forward.1} parent=0 // pred_check_branch
    %35 = sbr.rel (0) target = $region41
  $region40: #{cheb_encoder_forward.1} parent=0 // pred_region
    _
  $region41: #{cheb_encoder_forward.1} parent=0 // pred_fallthru
    _
  %p38 = scmp.lt.u32.totalorder 64, 8
  %p39 = pneg %p38
  // Predicated region
  $region42: #{cheb_encoder_forward.1} parent=0 // pred_check
    _
  $region43: #{cheb_encoder_forward.1} parent=0 // pred_check_branch
    %41 = sbr.rel (%p38) target = $region45
  $region44: #{cheb_encoder_forward.1} parent=0 // pred_region
    %s57 = sand.u32 64, 7
    %p58 = scmp.eq.s32.totalorder %s57, 0
    // Predicated region
    $region57: #{cheb_encoder_forward.1} parent=44 // pred_check
      %p59 = pneg %p58
    $region58: #{cheb_encoder_forward.1} parent=44 // pred_check_branch
      %61 = sbr.rel (%p59) target = $region60
    $region59: #{cheb_encoder_forward.1} parent=44 // pred_region
      loop: start=0, step=1, limit=1
      $region61: #{cheb_encoder_forward.1} parent=59 // loop_pre_header
        _
      $region62: #{cheb_encoder_forward.1} parent=59 // loop_header
        %s63 = sphi 0, %s67
        %p64 = scmp.ge.s32.totalorder %s63, 1
        %s68 = sphi %s0, %s0
        %s69 = sphi [#allocation2], [#allocation2]
      $region63: #{cheb_encoder_forward.1} parent=59 // loop_header_branch
        %66 = sbr.rel (%p64) target = $region67
      $region64: #{cheb_encoder_forward.1} parent=59 // loop_body
        %v70 = vld [vmem:[%s68] sm:$0xff]
        %71 = vst [vmem:[%s69] sm:$0xff] %v70
        %v72 = vld [vmem:[%s68 + $0x8] sm:$0xff]
        %73 = vst [vmem:[%s69 + $0x8] sm:$0xff] %v72
        %v74 = vld [vmem:[%s68 + $0x10] sm:$0xff]
        %75 = vst [vmem:[%s69 + $0x10] sm:$0xff] %v74
        %v76 = vld [vmem:[%s68 + $0x18] sm:$0xff]
        %77 = vst [vmem:[%s69 + $0x18] sm:$0xff] %v76
        %v78 = vld [vmem:[%s68 + $0x20] sm:$0xff]
        %79 = vst [vmem:[%s69 + $0x20] sm:$0xff] %v78
        %v80 = vld [vmem:[%s68 + $0x28] sm:$0xff]
        %81 = vst [vmem:[%s69 + $0x28] sm:$0xff] %v80
        %v82 = vld [vmem:[%s68 + $0x30] sm:$0xff]
        %83 = vst [vmem:[%s69 + $0x30] sm:$0xff] %v82
        %v84 = vld [vmem:[%s68 + $0x38] sm:$0xff]
        %85 = vst [vmem:[%s69 + $0x38] sm:$0xff] %v84
      $region65: #{cheb_encoder_forward.1} parent=59 // loop_footer
        %s67 = sadd.s32 1, %s63
      $region66: #{cheb_encoder_forward.1} parent=59 // loop_footer_branch
        %62 = sbr.rel target = $region62
      $region67: #{cheb_encoder_forward.1} parent=59 // loop_exit
        _
    $region60: #{cheb_encoder_forward.1} parent=44 // pred_fallthru
      _
    %p86 = pneg %p58
    // Predicated region
    $region68: #{cheb_encoder_forward.1} parent=44 // pred_check
      _
    $region69: #{cheb_encoder_forward.1} parent=44 // pred_check_branch
      %88 = sbr.rel (%p58) target = $region71
    $region70: #{cheb_encoder_forward.1} parent=44 // pred_region
      %s89 = sand.u32 64, 7
    $region71: #{cheb_encoder_forward.1} parent=44 // pred_fallthru
      _
  $region45: #{cheb_encoder_forward.1} parent=0 // pred_fallthru
    _
  // Predicated region
  $region46: #{cheb_encoder_forward.1} parent=0 // pred_check
    %p42 = pneg %p38
  $region47: #{cheb_encoder_forward.1} parent=0 // pred_check_branch
    %44 = sbr.rel (%p42) target = $region49
  $region48: #{cheb_encoder_forward.1} parent=0 // pred_region
    %s45 = sshll.u32 1, 64
    %s46 = ssub.s32 %s45, 1
    loop: start=0, step=1, limit=1
    $region50: #{cheb_encoder_forward.1} parent=48 // loop_pre_header
      _
    $region51: #{cheb_encoder_forward.1} parent=48 // loop_header
      %s48 = sphi 0, %s52
      %p49 = scmp.ge.s32.totalorder %s48, 1
      %s53 = sphi %s0, %s0
      %s54 = sphi [#allocation2], [#allocation2]
    $region52: #{cheb_encoder_forward.1} parent=48 // loop_header_branch
      %51 = sbr.rel (%p49) target = $region56
    $region53: #{cheb_encoder_forward.1} parent=48 // loop_body
      %v55 = vld [vmem:[%s53] sm:%s46]
      %56 = vst [vmem:[%s54] sm:%s46] %v55
    $region54: #{cheb_encoder_forward.1} parent=48 // loop_footer
      %s52 = sadd.s32 1, %s48
    $region55: #{cheb_encoder_forward.1} parent=48 // loop_footer_branch
      %47 = sbr.rel target = $region51
    $region56: #{cheb_encoder_forward.1} parent=48 // loop_exit
      _
  $region49: #{cheb_encoder_forward.1} parent=0 // pred_fallthru
    _
  // Predicated region
  $region72: #{cheb_encoder_forward.1} parent=0 // pred_check
    _
  $region73: #{cheb_encoder_forward.1} parent=0 // pred_check_branch
    %92 = sbr.rel (0) target = $region75
  $region74: #{cheb_encoder_forward.1} parent=0 // pred_region
    %93 = vsyncadd [#allocation3], 1024
  $region75: #{cheb_encoder_forward.1} parent=0 // pred_fallthru
    _
  %s94 = smul.u32 4, 16
  %s95 = smul.u32 %s94, 1
  %s96 = sshll.u32 %s95, 4
  %97 = dma.done [#allocation3], %s96
  %v98 = vld [vmem:[#allocation2] sm:$0xf]
  %v99 = vld [vmem:[#allocation2 + $0x4] sm:$0xf]
  %v100 = vld [vmem:[#allocation2 + $0x8] sm:$0xf]
  %v101 = vld [vmem:[#allocation2 + $0xc] sm:$0xf]
  %v102 = vld [vmem:[#allocation2 + $0x10] sm:$0xf]
  %v103 = vld [vmem:[#allocation2 + $0x14] sm:$0xf]
  %v104 = vld [vmem:[#allocation2 + $0x18] sm:$0xf]
  %v105 = vld [vmem:[#allocation2 + $0x1c] sm:$0xf]
  %v106 = vld [vmem:[#allocation2 + $0x20] sm:$0xf]
  %v107 = vld [vmem:[#allocation2 + $0x24] sm:$0xf]
  %v108 = vld [vmem:[#allocation2 + $0x28] sm:$0xf]
  %v109 = vld [vmem:[#allocation2 + $0x2c] sm:$0xf]
  %v110 = vld [vmem:[#allocation2 + $0x30] sm:$0xf]
  %v111 = vld [vmem:[#allocation2 + $0x34] sm:$0xf]
  %v112 = vld [vmem:[#allocation2 + $0x38] sm:$0xf]
  %v113 = vld [vmem:[#allocation2 + $0x3c] sm:$0xf]
  %v114 = vld [vmem:[%s1] sm:$0xff]
  %v115 = vld [vmem:[%s1 + $0x8] sm:$0xff]
  %v116 = vpack.c.bf16 %v115, %v114
  %v133 = vunpack.c.l.b16 %v98
  %v134 = vunpack.c.l.b16 %v99
  %v135 = vunpack.c.l.b16 %v100
  %v136 = vunpack.c.l.b16 %v101
  %v137 = vunpack.c.l.b16 %v102
  %v138 = vunpack.c.l.b16 %v103
  %v139 = vunpack.c.l.b16 %v104
  %v140 = vunpack.c.l.b16 %v105
  %v141 = vunpack.c.l.b16 %v106
  %v142 = vunpack.c.l.b16 %v107
  %v143 = vunpack.c.l.b16 %v108
  %v144 = vunpack.c.l.b16 %v109
  %v145 = vunpack.c.l.b16 %v110
  %v146 = vunpack.c.l.b16 %v111
  %v147 = vunpack.c.l.b16 %v112
  %v148 = vunpack.c.l.b16 %v113
  %v149 = vpack.c.b16 %v134, %v133
  %v150 = vpack.c.b16 %v136, %v135
  %v151 = vpack.c.b16 %v138, %v137
  %v152 = vpack.c.b16 %v140, %v139
  %v153 = vpack.c.b16 %v142, %v141
  %v154 = vpack.c.b16 %v144, %v143
  %v155 = vpack.c.b16 %v146, %v145
  %v156 = vpack.c.b16 %v148, %v147
  %165 = vmatprep.subr.bf16.mxu0 0
  %166 = vmatpush1.bf16.msra.mxu0 %v156
  %167 = vmatprep.subr.bf16.mxu0 0
  %168 = vmatpush1.bf16.msra.mxu0 %v155
  %169 = vmatprep.subr.bf16.mxu0 0
  %170 = vmatpush1.bf16.msra.mxu0 %v154
  %171 = vmatprep.subr.bf16.mxu0 0
  %172 = vmatpush1.bf16.msra.mxu0 %v153
  %173 = vmatprep.subr.bf16.mxu0 0
  %174 = vmatpush1.bf16.msra.mxu0 %v152
  %175 = vmatprep.subr.bf16.mxu0 0
  %176 = vmatpush1.bf16.msra.mxu0 %v151
  %177 = vmatprep.subr.bf16.mxu0 0
  %178 = vmatpush1.bf16.msra.mxu0 %v150
  %179 = vmatprep.subr.bf16.mxu0 0
  %180 = vmatpush1.bf16.msra.mxu0 %v149
  %181 = vmatprep.subr.bf16.mxu0 0
  %182 = vmatpush2.bf16.msra.mxu0 0
  %183 = vmatprep.subr.bf16.mxu0 0
  %184 = vmatpush2.bf16.msra.mxu0 0
  %185 = vmatprep.subr.bf16.mxu0 0
  %186 = vmatpush2.bf16.msra.mxu0 0
  %187 = vmatprep.subr.bf16.mxu0 0
  %188 = vmatpush2.bf16.msra.mxu0 0
  %189 = vmatprep.subr.bf16.mxu0 0
  %190 = vmatpush2.bf16.msra.mxu0 0
  %191 = vmatprep.subr.bf16.mxu0 0
  %192 = vmatpush2.bf16.msra.mxu0 0
  %193 = vmatprep.subr.bf16.mxu0 0
  %194 = vmatpush2.bf16.msra.mxu0 0
  %195 = vmatprep.subr.bf16.mxu0 0
  %196 = vmatpush2.bf16.msra.mxu0 0
  %197 = vmatprep.mubr.bf16.mxu0 0
  %198 = vmatmul.mubr.bf16.gmra.mxu0 %v116
  %v199 = vpop.f32.mrf.mxu0
  %v200 = vadd.f32 0.0, %v199
  %v201 = vpop.f32.mrf.mxu0
  %v202 = vpop.f32.mrf.mxu0
  %v203 = vadd.f32 0.0, %v202
  %v204 = vpop.f32.mrf.mxu0
  %205 = vdwg.mxu0
  %v206 = vpack.c.bf16 %v203, %v200
  %207 = vmatprep.subr.bf16.mxu0 0
  %208 = vmatpush1.bf16.msra.mxu0 %v156
  %209 = vmatprep.subr.bf16.mxu0 0
  %210 = vmatpush1.bf16.msra.mxu0 %v155
  %211 = vmatprep.subr.bf16.mxu0 0
  %212 = vmatpush1.bf16.msra.mxu0 %v154
  %213 = vmatprep.subr.bf16.mxu0 0
  %214 = vmatpush1.bf16.msra.mxu0 %v153
  %215 = vmatprep.subr.bf16.mxu0 0
  %216 = vmatpush1.bf16.msra.mxu0 %v152
  %217 = vmatprep.subr.bf16.mxu0 0
  %218 = vmatpush1.bf16.msra.mxu0 %v151
  %219 = vmatprep.subr.bf16.mxu0 0
  %220 = vmatpush1.bf16.msra.mxu0 %v150
  %221 = vmatprep.subr.bf16.mxu0 0
  %222 = vmatpush1.bf16.msra.mxu0 %v149
  %223 = vmatprep.subr.bf16.mxu0 0
  %224 = vmatpush2.bf16.msra.mxu0 0
  %225 = vmatprep.subr.bf16.mxu0 0
  %226 = vmatpush2.bf16.msra.mxu0 0
  %227 = vmatprep.subr.bf16.mxu0 0
  %228 = vmatpush2.bf16.msra.mxu0 0
  %229 = vmatprep.subr.bf16.mxu0 0
  %230 = vmatpush2.bf16.msra.mxu0 0
  %231 = vmatprep.subr.bf16.mxu0 0
  %232 = vmatpush2.bf16.msra.mxu0 0
  %233 = vmatprep.subr.bf16.mxu0 0
  %234 = vmatpush2.bf16.msra.mxu0 0
  %235 = vmatprep.subr.bf16.mxu0 0
  %236 = vmatpush2.bf16.msra.mxu0 0
  %237 = vmatprep.subr.bf16.mxu0 0
  %238 = vmatpush2.bf16.msra.mxu0 0
  %239 = vmatprep.mubr.bf16.mxu0 0
  %240 = vmatmul.mubr.bf16.gmra.mxu0 %v206
  %v241 = vpop.f32.mrf.mxu0
  %v242 = vadd.f32 0.0, %v241
  %v243 = vpop.f32.mrf.mxu0
  %v244 = vpop.f32.mrf.mxu0
  %v245 = vadd.f32 0.0, %v244
  %v246 = vpop.f32.mrf.mxu0
  %247 = vdwg.mxu0
  %v248 = vmul.f32 %v242, 2.0
  %v249 = vmul.f32 %v245, 2.0
  %v250 = vsub.f32 %v248, %v114
  %v251 = vsub.f32 %v249, %v115
  %v252 = vpack.c.bf16 %v251, %v250
  %v253 = vld [vmem:[%s2] sm:$0xf]
  %v254 = vld [vmem:[%s2 + $0x4] sm:$0xf]
  %v255 = vld [vmem:[%s2 + $0x8] sm:$0xf]
  %v256 = vld [vmem:[%s2 + $0xc] sm:$0xf]
  %s257 = scalar_lea.vmem %s2, 16
  %v258 = vld [vmem:[%s257] sm:$0xf]
  %v259 = vld [vmem:[%s257 + $0x4] sm:$0xf]
  %v260 = vld [vmem:[%s257 + $0x8] sm:$0xf]
  %v261 = vld [vmem:[%s257 + $0xc] sm:$0xf]
  %v266 = vunpack.c.l.b16 %v258
  %v267 = vunpack.c.l.b16 %v259
  %v268 = vunpack.c.l.b16 %v260
  %v269 = vunpack.c.l.b16 %v261
  %v270 = vpack.c.b16 %v267, %v266
  %v271 = vpack.c.b16 %v269, %v268
  %vm272 = vcmask 130048
  %v274 = vsel %vm272, %v270, 0
  %v277 = vsel %vm272, %v271, 0
  %279 = vmatprep.subr.bf16.mxu0 0
  %280 = vmatpush1.bf16.msra.mxu0 0
  %281 = vmatprep.subr.bf16.mxu0 0
  %282 = vmatpush1.bf16.msra.mxu0 0
  %283 = vmatprep.subr.bf16.mxu0 0
  %284 = vmatpush1.bf16.msra.mxu0 0
  %285 = vmatprep.subr.bf16.mxu0 0
  %286 = vmatpush1.bf16.msra.mxu0 0
  %287 = vmatprep.subr.bf16.mxu0 0
  %288 = vmatpush1.bf16.msra.mxu0 0
  %289 = vmatprep.subr.bf16.mxu0 0
  %290 = vmatpush1.bf16.msra.mxu0 0
  %291 = vmatprep.subr.bf16.mxu0 0
  %292 = vmatpush1.bf16.msra.mxu0 0
  %293 = vmatprep.subr.bf16.mxu0 0
  %294 = vmatpush1.bf16.msra.mxu0 %v206
  %295 = vmatprep.subr.bf16.mxu0 0
  %296 = vmatpush2.bf16.msra.mxu0 0
  %297 = vmatprep.subr.bf16.mxu0 0
  %298 = vmatpush2.bf16.msra.mxu0 0
  %299 = vmatprep.subr.bf16.mxu0 0
  %300 = vmatpush2.bf16.msra.mxu0 0
  %301 = vmatprep.subr.bf16.mxu0 0
  %302 = vmatpush2.bf16.msra.mxu0 0
  %303 = vmatprep.subr.bf16.mxu0 0
  %304 = vmatpush2.bf16.msra.mxu0 0
  %305 = vmatprep.subr.bf16.mxu0 0
  %306 = vmatpush2.bf16.msra.mxu0 0
  %307 = vmatprep.subr.bf16.mxu0 0
  %308 = vmatpush2.bf16.msra.mxu0 0
  %309 = vmatprep.subr.bf16.mxu0 0
  %310 = vmatpush2.bf16.msra.mxu0 0
  %311 = vmatprep.mubr.bf16.mxu0 0
  %312 = vmatmul.mubr.bf16.gmra.mxu0 %v274
  %v313 = vpop.f32.mrf.mxu0
  %v314 = vadd.f32 0.0, %v313
  %v315 = vpop.f32.mrf.mxu0
  %v316 = vpop.f32.mrf.mxu0
  %v317 = vadd.f32 0.0, %v316
  %v318 = vpop.f32.mrf.mxu0
  %319 = vmatprep.mubr.bf16.mxu0 0
  %320 = vmatmul.mubr.bf16.gmra.mxu0 %v277
  %v321 = vpop.f32.mrf.mxu0
  %v322 = vadd.f32 0.0, %v321
  %v323 = vpop.f32.mrf.mxu0
  %v324 = vpop.f32.mrf.mxu0
  %v325 = vadd.f32 0.0, %v324
  %v326 = vpop.f32.mrf.mxu0
  %327 = vdwg.mxu0
  %v332 = vunpack.c.l.b16 %v253
  %v333 = vunpack.c.l.b16 %v254
  %v334 = vunpack.c.l.b16 %v255
  %v335 = vunpack.c.l.b16 %v256
  %v336 = vpack.c.b16 %v333, %v332
  %v337 = vpack.c.b16 %v335, %v334
  %v339 = vsel %vm272, %v336, 0
  %v342 = vsel %vm272, %v337, 0
  %344 = vmatprep.subr.bf16.mxu0 0
  %345 = vmatpush1.bf16.msra.mxu0 0
  %346 = vmatprep.subr.bf16.mxu0 0
  %347 = vmatpush1.bf16.msra.mxu0 0
  %348 = vmatprep.subr.bf16.mxu0 0
  %349 = vmatpush1.bf16.msra.mxu0 0
  %350 = vmatprep.subr.bf16.mxu0 0
  %351 = vmatpush1.bf16.msra.mxu0 0
  %352 = vmatprep.subr.bf16.mxu0 0
  %353 = vmatpush1.bf16.msra.mxu0 0
  %354 = vmatprep.subr.bf16.mxu0 0
  %355 = vmatpush1.bf16.msra.mxu0 0
  %356 = vmatprep.subr.bf16.mxu0 0
  %357 = vmatpush1.bf16.msra.mxu0 0
  %358 = vmatprep.subr.bf16.mxu0 0
  %359 = vmatpush1.bf16.msra.mxu0 %v116
  %360 = vmatprep.subr.bf16.mxu0 0
  %361 = vmatpush2.bf16.msra.mxu0 0
  %362 = vmatprep.subr.bf16.mxu0 0
  %363 = vmatpush2.bf16.msra.mxu0 0
  %364 = vmatprep.subr.bf16.mxu0 0
  %365 = vmatpush2.bf16.msra.mxu0 0
  %366 = vmatprep.subr.bf16.mxu0 0
  %367 = vmatpush2.bf16.msra.mxu0 0
  %368 = vmatprep.subr.bf16.mxu0 0
  %369 = vmatpush2.bf16.msra.mxu0 0
  %370 = vmatprep.subr.bf16.mxu0 0
  %371 = vmatpush2.bf16.msra.mxu0 0
  %372 = vmatprep.subr.bf16.mxu0 0
  %373 = vmatpush2.bf16.msra.mxu0 0
  %374 = vmatprep.subr.bf16.mxu0 0
  %375 = vmatpush2.bf16.msra.mxu0 0
  %376 = vmatprep.mubr.bf16.mxu0 0
  %377 = vmatmul.mubr.bf16.gmra.mxu0 %v339
  %v378 = vpop.f32.mrf.mxu0
  %v379 = vadd.f32 %v314, %v378
  %v380 = vpop.f32.mrf.mxu0
  %v381 = vpop.f32.mrf.mxu0
  %v382 = vadd.f32 %v317, %v381
  %v383 = vpop.f32.mrf.mxu0
  %384 = vmatprep.mubr.bf16.mxu0 0
  %385 = vmatmul.mubr.bf16.gmra.mxu0 %v342
  %v386 = vpop.f32.mrf.mxu0
  %v387 = vadd.f32 %v322, %v386
  %v388 = vpop.f32.mrf.mxu0
  %v389 = vpop.f32.mrf.mxu0
  %v390 = vadd.f32 %v325, %v389
  %v391 = vpop.f32.mrf.mxu0
  %392 = vdwg.mxu0
  %s393 = scalar_lea.vmem %s2, 32
  %v394 = vld [vmem:[%s393] sm:$0xf]
  %v395 = vld [vmem:[%s393 + $0x4] sm:$0xf]
  %v396 = vld [vmem:[%s393 + $0x8] sm:$0xf]
  %v397 = vld [vmem:[%s393 + $0xc] sm:$0xf]
  %v402 = vunpack.c.l.b16 %v394
  %v403 = vunpack.c.l.b16 %v395
  %v404 = vunpack.c.l.b16 %v396
  %v405 = vunpack.c.l.b16 %v397
  %v406 = vpack.c.b16 %v403, %v402
  %v407 = vpack.c.b16 %v405, %v404
  %v409 = vsel %vm272, %v406, 0
  %v412 = vsel %vm272, %v407, 0
  %414 = vmatprep.subr.bf16.mxu0 0
  %415 = vmatpush1.bf16.msra.mxu0 0
  %416 = vmatprep.subr.bf16.mxu0 0
  %417 = vmatpush1.bf16.msra.mxu0 0
  %418 = vmatprep.subr.bf16.mxu0 0
  %419 = vmatpush1.bf16.msra.mxu0 0
  %420 = vmatprep.subr.bf16.mxu0 0
  %421 = vmatpush1.bf16.msra.mxu0 0
  %422 = vmatprep.subr.bf16.mxu0 0
  %423 = vmatpush1.bf16.msra.mxu0 0
  %424 = vmatprep.subr.bf16.mxu0 0
  %425 = vmatpush1.bf16.msra.mxu0 0
  %426 = vmatprep.subr.bf16.mxu0 0
  %427 = vmatpush1.bf16.msra.mxu0 0
  %428 = vmatprep.subr.bf16.mxu0 0
  %429 = vmatpush1.bf16.msra.mxu0 %v252
  %430 = vmatprep.subr.bf16.mxu0 0
  %431 = vmatpush2.bf16.msra.mxu0 0
  %432 = vmatprep.subr.bf16.mxu0 0
  %433 = vmatpush2.bf16.msra.mxu0 0
  %434 = vmatprep.subr.bf16.mxu0 0
  %435 = vmatpush2.bf16.msra.mxu0 0
  %436 = vmatprep.subr.bf16.mxu0 0
  %437 = vmatpush2.bf16.msra.mxu0 0
  %438 = vmatprep.subr.bf16.mxu0 0
  %439 = vmatpush2.bf16.msra.mxu0 0
  %440 = vmatprep.subr.bf16.mxu0 0
  %441 = vmatpush2.bf16.msra.mxu0 0
  %442 = vmatprep.subr.bf16.mxu0 0
  %443 = vmatpush2.bf16.msra.mxu0 0
  %444 = vmatprep.subr.bf16.mxu0 0
  %445 = vmatpush2.bf16.msra.mxu0 0
  %446 = vmatprep.mubr.bf16.mxu0 0
  %447 = vmatmul.mubr.bf16.gmra.mxu0 %v409
  %v448 = vpop.f32.mrf.mxu0
  %v449 = vadd.f32 0.0, %v448
  %v450 = vpop.f32.mrf.mxu0
  %v451 = vpop.f32.mrf.mxu0
  %v452 = vadd.f32 0.0, %v451
  %v453 = vpop.f32.mrf.mxu0
  %454 = vmatprep.mubr.bf16.mxu0 0
  %455 = vmatmul.mubr.bf16.gmra.mxu0 %v412
  %v456 = vpop.f32.mrf.mxu0
  %v457 = vadd.f32 0.0, %v456
  %v458 = vpop.f32.mrf.mxu0
  %v459 = vpop.f32.mrf.mxu0
  %v460 = vadd.f32 0.0, %v459
  %v461 = vpop.f32.mrf.mxu0
  %462 = vdwg.mxu0
  %v463 = vadd.f32 %v379, %v449
  %v464 = vadd.f32 %v382, %v452
  %v465 = vadd.f32 %v387, %v457
  %v466 = vadd.f32 %v390, %v460
  %v467 = vld [vmem:[%s3] sm:$0xff]
  %v468 = vld [vmem:[%s3 + $0x8] sm:$0xff]
  %v469 = vld [vmem:[%s3 + $0x10] sm:$0xff]
  %v470 = vld [vmem:[%s3 + $0x18] sm:$0xff]
  %472 = vset.pattern.permute.xlu0 0
  %473 = vperm.xlu0 %472, %v467
  %v474 = vpop.permute.xlu0 %473
  %477 = vset.pattern.permute.xlu0 0
  %478 = vperm.xlu0 %477, %v468
  %v479 = vpop.permute.xlu0 %478
  %482 = vset.pattern.permute.xlu0 0
  %483 = vperm.xlu0 %482, %v469
  %v484 = vpop.permute.xlu0 %483
  %487 = vset.pattern.permute.xlu0 0
  %488 = vperm.xlu0 %487, %v470
  %v489 = vpop.permute.xlu0 %488
  %v491 = vadd.f32 %v463, %v474
  %v492 = vadd.f32 %v464, %v479
  %v493 = vadd.f32 %v465, %v484
  %v494 = vadd.f32 %v466, %v489
  %v495 = vmul.f32 %v491, 0.2
  %v496 = vmul.f32 %v492, 0.2
  %v497 = vmul.f32 %v493, 0.2
  %v498 = vmul.f32 %v494, 0.2
  %v499 = vmax.f32 %v491, %v495
  %v500 = vmax.f32 %v492, %v496
  %v501 = vmax.f32 %v493, %v497
  %v502 = vmax.f32 %v494, %v498
  %v503 = vpack.c.bf16 %v500, %v499
  %v504 = vpack.c.bf16 %v502, %v501
  %505 = vmatprep.subr.bf16.mxu0 0
  %506 = vmatpush1.bf16.msra.mxu0 %v156
  %507 = vmatprep.subr.bf16.mxu0 0
  %508 = vmatpush1.bf16.msra.mxu0 %v155
  %509 = vmatprep.subr.bf16.mxu0 0
  %510 = vmatpush1.bf16.msra.mxu0 %v154
  %511 = vmatprep.subr.bf16.mxu0 0
  %512 = vmatpush1.bf16.msra.mxu0 %v153
  %513 = vmatprep.subr.bf16.mxu0 0
  %514 = vmatpush1.bf16.msra.mxu0 %v152
  %515 = vmatprep.subr.bf16.mxu0 0
  %516 = vmatpush1.bf16.msra.mxu0 %v151
  %517 = vmatprep.subr.bf16.mxu0 0
  %518 = vmatpush1.bf16.msra.mxu0 %v150
  %519 = vmatprep.subr.bf16.mxu0 0
  %520 = vmatpush1.bf16.msra.mxu0 %v149
  %521 = vmatprep.subr.bf16.mxu0 0
  %522 = vmatpush2.bf16.msra.mxu0 0
  %523 = vmatprep.subr.bf16.mxu0 0
  %524 = vmatpush2.bf16.msra.mxu0 0
  %525 = vmatprep.subr.bf16.mxu0 0
  %526 = vmatpush2.bf16.msra.mxu0 0
  %527 = vmatprep.subr.bf16.mxu0 0
  %528 = vmatpush2.bf16.msra.mxu0 0
  %529 = vmatprep.subr.bf16.mxu0 0
  %530 = vmatpush2.bf16.msra.mxu0 0
  %531 = vmatprep.subr.bf16.mxu0 0
  %532 = vmatpush2.bf16.msra.mxu0 0
  %533 = vmatprep.subr.bf16.mxu0 0
  %534 = vmatpush2.bf16.msra.mxu0 0
  %535 = vmatprep.subr.bf16.mxu0 0
  %536 = vmatpush2.bf16.msra.mxu0 0
  %537 = vmatprep.mubr.bf16.mxu0 0
  %538 = vmatmul.mubr.bf16.gmra.mxu0 %v503
  %v539 = vpop.f32.mrf.mxu0
  %v540 = vadd.f32 0.0, %v539
  %v541 = vpop.f32.mrf.mxu0
  %v542 = vpop.f32.mrf.mxu0
  %v543 = vadd.f32 0.0, %v542
  %v544 = vpop.f32.mrf.mxu0
  %545 = vmatprep.mubr.bf16.mxu0 0
  %546 = vmatmul.mubr.bf16.gmra.mxu0 %v504
  %v547 = vpop.f32.mrf.mxu0
  %v548 = vadd.f32 0.0, %v547
  %v549 = vpop.f32.mrf.mxu0
  %v550 = vpop.f32.mrf.mxu0
  %v551 = vadd.f32 0.0, %v550
  %v552 = vpop.f32.mrf.mxu0
  %553 = vdwg.mxu0
  %v554 = vpack.c.bf16 %v543, %v540
  %v555 = vpack.c.bf16 %v551, %v548
  %556 = vmatprep.subr.bf16.mxu0 0
  %557 = vmatpush1.bf16.msra.mxu0 %v156
  %558 = vmatprep.subr.bf16.mxu0 0
  %559 = vmatpush1.bf16.msra.mxu0 %v155
  %560 = vmatprep.subr.bf16.mxu0 0
  %561 = vmatpush1.bf16.msra.mxu0 %v154
  %562 = vmatprep.subr.bf16.mxu0 0
  %563 = vmatpush1.bf16.msra.mxu0 %v153
  %564 = vmatprep.subr.bf16.mxu0 0
  %565 = vmatpush1.bf16.msra.mxu0 %v152
  %566 = vmatprep.subr.bf16.mxu0 0
  %567 = vmatpush1.bf16.msra.mxu0 %v151
  %568 = vmatprep.subr.bf16.mxu0 0
  %569 = vmatpush1.bf16.msra.mxu0 %v150
  %570 = vmatprep.subr.bf16.mxu0 0
  %571 = vmatpush1.bf16.msra.mxu0 %v149
  %572 = vmatprep.subr.bf16.mxu0 0
  %573 = vmatpush2.bf16.msra.mxu0 0
  %574 = vmatprep.subr.bf16.mxu0 0
  %575 = vmatpush2.bf16.msra.mxu0 0
  %576 = vmatprep.subr.bf16.mxu0 0
  %577 = vmatpush2.bf16.msra.mxu0 0
  %578 = vmatprep.subr.bf16.mxu0 0
  %579 = vmatpush2.bf16.msra.mxu0 0
  %580 = vmatprep.subr.bf16.mxu0 0
  %581 = vmatpush2.bf16.msra.mxu0 0
  %582 = vmatprep.subr.bf16.mxu0 0
  %583 = vmatpush2.bf16.msra.mxu0 0
  %584 = vmatprep.subr.bf16.mxu0 0
  %585 = vmatpush2.bf16.msra.mxu0 0
  %586 = vmatprep.subr.bf16.mxu0 0
  %587 = vmatpush2.bf16.msra.mxu0 0
  %588 = vmatprep.mubr.bf16.mxu0 0
  %589 = vmatmul.mubr.bf16.gmra.mxu0 %v554
  %v590 = vpop.f32.mrf.mxu0
  %v591 = vadd.f32 0.0, %v590
  %v592 = vpop.f32.mrf.mxu0
  %v593 = vpop.f32.mrf.mxu0
  %v594 = vadd.f32 0.0, %v593
  %v595 = vpop.f32.mrf.mxu0
  %596 = vmatprep.mubr.bf16.mxu0 0
  %597 = vmatmul.mubr.bf16.gmra.mxu0 %v555
  %v598 = vpop.f32.mrf.mxu0
  %v599 = vadd.f32 0.0, %v598
  %v600 = vpop.f32.mrf.mxu0
  %v601 = vpop.f32.mrf.mxu0
  %v602 = vadd.f32 0.0, %v601
  %v603 = vpop.f32.mrf.mxu0
  %604 = vdwg.mxu0
  %v605 = vmul.f32 %v591, 2.0
  %v606 = vmul.f32 %v594, 2.0
  %v607 = vmul.f32 %v599, 2.0
  %v608 = vmul.f32 %v602, 2.0
  %v609 = vsub.f32 %v605, %v499
  %v610 = vsub.f32 %v606, %v500
  %v611 = vsub.f32 %v607, %v501
  %v612 = vsub.f32 %v608, %v502
  %v613 = vpack.c.bf16 %v610, %v609
  %v614 = vpack.c.bf16 %v612, %v611
  %v615 = vld [vmem:[%s4] sm:$0xf]
  %v616 = vld [vmem:[%s4 + $0x4] sm:$0xf]
  %v617 = vld [vmem:[%s4 + $0x8] sm:$0xf]
  %v618 = vld [vmem:[%s4 + $0xc] sm:$0xf]
  %s619 = scalar_lea.vmem %s4, 16
  %v620 = vld [vmem:[%s619] sm:$0xf]
  %v621 = vld [vmem:[%s619 + $0x4] sm:$0xf]
  %v622 = vld [vmem:[%s619 + $0x8] sm:$0xf]
  %v623 = vld [vmem:[%s619 + $0xc] sm:$0xf]
  %v628 = vunpack.c.l.b16 %v620
  %v629 = vunpack.c.l.b16 %v621
  %v630 = vunpack.c.l.b16 %v622
  %v631 = vunpack.c.l.b16 %v623
  %v632 = vpack.c.b16 %v629, %v628
  %v633 = vpack.c.b16 %v631, %v630
  %vm634 = vcmask 261120
  %v636 = vsel %vm634, %v632, 0
  %v639 = vsel %vm634, %v633, 0
  %641 = vmatprep.subr.bf16.mxu0 0
  %642 = vmatpush1.bf16.msra.mxu0 0
  %643 = vmatprep.subr.bf16.mxu0 0
  %644 = vmatpush1.bf16.msra.mxu0 0
  %645 = vmatprep.subr.bf16.mxu0 0
  %646 = vmatpush1.bf16.msra.mxu0 0
  %647 = vmatprep.subr.bf16.mxu0 0
  %648 = vmatpush1.bf16.msra.mxu0 0
  %649 = vmatprep.subr.bf16.mxu0 0
  %650 = vmatpush1.bf16.msra.mxu0 0
  %651 = vmatprep.subr.bf16.mxu0 0
  %652 = vmatpush1.bf16.msra.mxu0 0
  %653 = vmatprep.subr.bf16.mxu0 0
  %654 = vmatpush1.bf16.msra.mxu0 %v555
  %655 = vmatprep.subr.bf16.mxu0 0
  %656 = vmatpush1.bf16.msra.mxu0 %v554
  %657 = vmatprep.subr.bf16.mxu0 0
  %658 = vmatpush2.bf16.msra.mxu0 0
  %659 = vmatprep.subr.bf16.mxu0 0
  %660 = vmatpush2.bf16.msra.mxu0 0
  %661 = vmatprep.subr.bf16.mxu0 0
  %662 = vmatpush2.bf16.msra.mxu0 0
  %663 = vmatprep.subr.bf16.mxu0 0
  %664 = vmatpush2.bf16.msra.mxu0 0
  %665 = vmatprep.subr.bf16.mxu0 0
  %666 = vmatpush2.bf16.msra.mxu0 0
  %667 = vmatprep.subr.bf16.mxu0 0
  %668 = vmatpush2.bf16.msra.mxu0 0
  %669 = vmatprep.subr.bf16.mxu0 0
  %670 = vmatpush2.bf16.msra.mxu0 0
  %671 = vmatprep.subr.bf16.mxu0 0
  %672 = vmatpush2.bf16.msra.mxu0 0
  %673 = vmatprep.mubr.bf16.mxu0 0
  %674 = vmatmul.mubr.bf16.gmra.mxu0 %v636
  %v675 = vpop.f32.mrf.mxu0
  %v676 = vadd.f32 0.0, %v675
  %v677 = vpop.f32.mrf.mxu0
  %v678 = vpop.f32.mrf.mxu0
  %v679 = vadd.f32 0.0, %v678
  %v680 = vpop.f32.mrf.mxu0
  %681 = vmatprep.mubr.bf16.mxu0 0
  %682 = vmatmul.mubr.bf16.gmra.mxu0 %v639
  %v683 = vpop.f32.mrf.mxu0
  %v684 = vadd.f32 0.0, %v683
  %v685 = vpop.f32.mrf.mxu0
  %v686 = vpop.f32.mrf.mxu0
  %v687 = vadd.f32 0.0, %v686
  %v688 = vpop.f32.mrf.mxu0
  %689 = vdwg.mxu0
  %v694 = vunpack.c.l.b16 %v615
  %v695 = vunpack.c.l.b16 %v616
  %v696 = vunpack.c.l.b16 %v617
  %v697 = vunpack.c.l.b16 %v618
  %v698 = vpack.c.b16 %v695, %v694
  %v699 = vpack.c.b16 %v697, %v696
  %v701 = vsel %vm634, %v698, 0
  %v704 = vsel %vm634, %v699, 0
  %706 = vmatprep.subr.bf16.mxu0 0
  %707 = vmatpush1.bf16.msra.mxu0 0
  %708 = vmatprep.subr.bf16.mxu0 0
  %709 = vmatpush1.bf16.msra.mxu0 0
  %710 = vmatprep.subr.bf16.mxu0 0
  %711 = vmatpush1.bf16.msra.mxu0 0
  %712 = vmatprep.subr.bf16.mxu0 0
  %713 = vmatpush1.bf16.msra.mxu0 0
  %714 = vmatprep.subr.bf16.mxu0 0
  %715 = vmatpush1.bf16.msra.mxu0 0
  %716 = vmatprep.subr.bf16.mxu0 0
  %717 = vmatpush1.bf16.msra.mxu0 0
  %718 = vmatprep.subr.bf16.mxu0 0
  %719 = vmatpush1.bf16.msra.mxu0 %v504
  %720 = vmatprep.subr.bf16.mxu0 0
  %721 = vmatpush1.bf16.msra.mxu0 %v503
  %722 = vmatprep.subr.bf16.mxu0 0
  %723 = vmatpush2.bf16.msra.mxu0 0
  %724 = vmatprep.subr.bf16.mxu0 0
  %725 = vmatpush2.bf16.msra.mxu0 0
  %726 = vmatprep.subr.bf16.mxu0 0
  %727 = vmatpush2.bf16.msra.mxu0 0
  %728 = vmatprep.subr.bf16.mxu0 0
  %729 = vmatpush2.bf16.msra.mxu0 0
  %730 = vmatprep.subr.bf16.mxu0 0
  %731 = vmatpush2.bf16.msra.mxu0 0
  %732 = vmatprep.subr.bf16.mxu0 0
  %733 = vmatpush2.bf16.msra.mxu0 0
  %734 = vmatprep.subr.bf16.mxu0 0
  %735 = vmatpush2.bf16.msra.mxu0 0
  %736 = vmatprep.subr.bf16.mxu0 0
  %737 = vmatpush2.bf16.msra.mxu0 0
  %738 = vmatprep.mubr.bf16.mxu0 0
  %739 = vmatmul.mubr.bf16.gmra.mxu0 %v701
  %v740 = vpop.f32.mrf.mxu0
  %v741 = vadd.f32 %v676, %v740
  %v742 = vpop.f32.mrf.mxu0
  %v743 = vpop.f32.mrf.mxu0
  %v744 = vadd.f32 %v679, %v743
  %v745 = vpop.f32.mrf.mxu0
  %746 = vmatprep.mubr.bf16.mxu0 0
  %747 = vmatmul.mubr.bf16.gmra.mxu0 %v704
  %v748 = vpop.f32.mrf.mxu0
  %v749 = vadd.f32 %v684, %v748
  %v750 = vpop.f32.mrf.mxu0
  %v751 = vpop.f32.mrf.mxu0
  %v752 = vadd.f32 %v687, %v751
  %v753 = vpop.f32.mrf.mxu0
  %754 = vdwg.mxu0
  %s755 = scalar_lea.vmem %s4, 32
  %v756 = vld [vmem:[%s755] sm:$0xf]
  %v757 = vld [vmem:[%s755 + $0x4] sm:$0xf]
  %v758 = vld [vmem:[%s755 + $0x8] sm:$0xf]
  %v759 = vld [vmem:[%s755 + $0xc] sm:$0xf]
  %v764 = vunpack.c.l.b16 %v756
  %v765 = vunpack.c.l.b16 %v757
  %v766 = vunpack.c.l.b16 %v758
  %v767 = vunpack.c.l.b16 %v759
  %v768 = vpack.c.b16 %v765, %v764
  %v769 = vpack.c.b16 %v767, %v766
  %v771 = vsel %vm634, %v768, 0
  %v774 = vsel %vm634, %v769, 0
  %776 = vmatprep.subr.bf16.mxu0 0
  %777 = vmatpush1.bf16.msra.mxu0 0
  %778 = vmatprep.subr.bf16.mxu0 0
  %779 = vmatpush1.bf16.msra.mxu0 0
  %780 = vmatprep.subr.bf16.mxu0 0
  %781 = vmatpush1.bf16.msra.mxu0 0
  %782 = vmatprep.subr.bf16.mxu0 0
  %783 = vmatpush1.bf16.msra.mxu0 0
  %784 = vmatprep.subr.bf16.mxu0 0
  %785 = vmatpush1.bf16.msra.mxu0 0
  %786 = vmatprep.subr.bf16.mxu0 0
  %787 = vmatpush1.bf16.msra.mxu0 0
  %788 = vmatprep.subr.bf16.mxu0 0
  %789 = vmatpush1.bf16.msra.mxu0 %v614
  %790 = vmatprep.subr.bf16.mxu0 0
  %791 = vmatpush1.bf16.msra.mxu0 %v613
  %792 = vmatprep.subr.bf16.mxu0 0
  %793 = vmatpush2.bf16.msra.mxu0 0
  %794 = vmatprep.subr.bf16.mxu0 0
  %795 = vmatpush2.bf16.msra.mxu0 0
  %796 = vmatprep.subr.bf16.mxu0 0
  %797 = vmatpush2.bf16.msra.mxu0 0
  %798 = vmatprep.subr.bf16.mxu0 0
  %799 = vmatpush2.bf16.msra.mxu0 0
  %800 = vmatprep.subr.bf16.mxu0 0
  %801 = vmatpush2.bf16.msra.mxu0 0
  %802 = vmatprep.subr.bf16.mxu0 0
  %803 = vmatpush2.bf16.msra.mxu0 0
  %804 = vmatprep.subr.bf16.mxu0 0
  %805 = vmatpush2.bf16.msra.mxu0 0
  %806 = vmatprep.subr.bf16.mxu0 0
  %807 = vmatpush2.bf16.msra.mxu0 0
  %808 = vmatprep.mubr.bf16.mxu0 0
  %809 = vmatmul.mubr.bf16.gmra.mxu0 %v771
  %v810 = vpop.f32.mrf.mxu0
  %v811 = vadd.f32 0.0, %v810
  %v812 = vpop.f32.mrf.mxu0
  %v813 = vpop.f32.mrf.mxu0
  %v814 = vadd.f32 0.0, %v813
  %v815 = vpop.f32.mrf.mxu0
  %816 = vmatprep.mubr.bf16.mxu0 0
  %817 = vmatmul.mubr.bf16.gmra.mxu0 %v774
  %v818 = vpop.f32.mrf.mxu0
  %v819 = vadd.f32 0.0, %v818
  %v820 = vpop.f32.mrf.mxu0
  %v821 = vpop.f32.mrf.mxu0
  %v822 = vadd.f32 0.0, %v821
  %v823 = vpop.f32.mrf.mxu0
  %824 = vdwg.mxu0
  %v825 = vadd.f32 %v741, %v811
  %v826 = vadd.f32 %v744, %v814
  %v827 = vadd.f32 %v749, %v819
  %v828 = vadd.f32 %v752, %v822
  %v829 = vld [vmem:[%s5] sm:$0xff]
  %v830 = vld [vmem:[%s5 + $0x8] sm:$0xff]
  %v831 = vld [vmem:[%s5 + $0x10] sm:$0xff]
  %v832 = vld [vmem:[%s5 + $0x18] sm:$0xff]
  %834 = vset.pattern.permute.xlu0 0
  %835 = vperm.xlu0 %834, %v829
  %v836 = vpop.permute.xlu0 %835
  %839 = vset.pattern.permute.xlu0 0
  %840 = vperm.xlu0 %839, %v830
  %v841 = vpop.permute.xlu0 %840
  %844 = vset.pattern.permute.xlu0 0
  %845 = vperm.xlu0 %844, %v831
  %v846 = vpop.permute.xlu0 %845
  %849 = vset.pattern.permute.xlu0 0
  %850 = vperm.xlu0 %849, %v832
  %v851 = vpop.permute.xlu0 %850
  %v853 = vadd.f32 %v825, %v836
  %v854 = vadd.f32 %v826, %v841
  %v855 = vadd.f32 %v827, %v846
  %v856 = vadd.f32 %v828, %v851
  %v857 = vmul.f32 %v853, 0.2
  %v858 = vmul.f32 %v854, 0.2
  %v859 = vmul.f32 %v855, 0.2
  %v860 = vmul.f32 %v856, 0.2
  %v861 = vmax.f32 %v853, %v857
  %v862 = vmax.f32 %v854, %v858
  %v863 = vmax.f32 %v855, %v859
  %v864 = vmax.f32 %v856, %v860
  %v865 = vpack.c.bf16 %v862, %v861
  %v866 = vpack.c.bf16 %v864, %v863
  %v867 = vld [vmem:[%s6] sm:$0xf]
  %v868 = vld [vmem:[%s6 + $0x4] sm:$0xf]
  %v869 = vld [vmem:[%s6 + $0x8] sm:$0xf]
  %v870 = vld [vmem:[%s6 + $0xc] sm:$0xf]
  %v871 = vld [vmem:[%s6 + $0x10] sm:$0xf]
  %v872 = vld [vmem:[%s6 + $0x14] sm:$0xf]
  %v873 = vld [vmem:[%s6 + $0x18] sm:$0xf]
  %v874 = vld [vmem:[%s6 + $0x1c] sm:$0xf]
  %v875 = vld [vmem:[%s6 + $0x20] sm:$0xf]
  %v876 = vld [vmem:[%s6 + $0x24] sm:$0xf]
  %v877 = vld [vmem:[%s6 + $0x28] sm:$0xf]
  %v878 = vld [vmem:[%s6 + $0x2c] sm:$0xf]
  %v879 = vld [vmem:[%s6 + $0x30] sm:$0xf]
  %v880 = vld [vmem:[%s6 + $0x34] sm:$0xf]
  %v881 = vld [vmem:[%s6 + $0x38] sm:$0xf]
  %v882 = vld [vmem:[%s6 + $0x3c] sm:$0xf]
  %v899 = vunpack.c.l.b16 %v867
  %v900 = vunpack.c.l.b16 %v868
  %v901 = vunpack.c.l.b16 %v869
  %v902 = vunpack.c.l.b16 %v870
  %v903 = vunpack.c.l.b16 %v871
  %v904 = vunpack.c.l.b16 %v872
  %v905 = vunpack.c.l.b16 %v873
  %v906 = vunpack.c.l.b16 %v874
  %v907 = vunpack.c.l.b16 %v875
  %v908 = vunpack.c.l.b16 %v876
  %v909 = vunpack.c.l.b16 %v877
  %v910 = vunpack.c.l.b16 %v878
  %v911 = vunpack.c.l.b16 %v879
  %v912 = vunpack.c.l.b16 %v880
  %v913 = vunpack.c.l.b16 %v881
  %v914 = vunpack.c.l.b16 %v882
  %v915 = vpack.c.b16 %v900, %v899
  %v916 = vpack.c.b16 %v902, %v901
  %v917 = vpack.c.b16 %v904, %v903
  %v918 = vpack.c.b16 %v906, %v905
  %v919 = vpack.c.b16 %v908, %v907
  %v920 = vpack.c.b16 %v910, %v909
  %v921 = vpack.c.b16 %v912, %v911
  %v922 = vpack.c.b16 %v914, %v913
  %931 = vmatprep.subr.bf16.mxu0 0
  %932 = vmatpush1.bf16.msra.mxu0 %v922
  %933 = vmatprep.subr.bf16.mxu0 0
  %934 = vmatpush1.bf16.msra.mxu0 %v921
  %935 = vmatprep.subr.bf16.mxu0 0
  %936 = vmatpush1.bf16.msra.mxu0 %v920
  %937 = vmatprep.subr.bf16.mxu0 0
  %938 = vmatpush1.bf16.msra.mxu0 %v919
  %939 = vmatprep.subr.bf16.mxu0 0
  %940 = vmatpush1.bf16.msra.mxu0 %v918
  %941 = vmatprep.subr.bf16.mxu0 0
  %942 = vmatpush1.bf16.msra.mxu0 %v917
  %943 = vmatprep.subr.bf16.mxu0 0
  %944 = vmatpush1.bf16.msra.mxu0 %v916
  %945 = vmatprep.subr.bf16.mxu0 0
  %946 = vmatpush1.bf16.msra.mxu0 %v915
  %947 = vmatprep.subr.bf16.mxu0 0
  %948 = vmatpush2.bf16.msra.mxu0 0
  %949 = vmatprep.subr.bf16.mxu0 0
  %950 = vmatpush2.bf16.msra.mxu0 0
  %951 = vmatprep.subr.bf16.mxu0 0
  %952 = vmatpush2.bf16.msra.mxu0 0
  %953 = vmatprep.subr.bf16.mxu0 0
  %954 = vmatpush2.bf16.msra.mxu0 0
  %955 = vmatprep.subr.bf16.mxu0 0
  %956 = vmatpush2.bf16.msra.mxu0 0
  %957 = vmatprep.subr.bf16.mxu0 0
  %958 = vmatpush2.bf16.msra.mxu0 0
  %959 = vmatprep.subr.bf16.mxu0 0
  %960 = vmatpush2.bf16.msra.mxu0 0
  %961 = vmatprep.subr.bf16.mxu0 0
  %962 = vmatpush2.bf16.msra.mxu0 0
  %963 = vmatprep.mubr.bf16.mxu0 0
  %964 = vmatmul.mubr.bf16.gmra.mxu0 %v865
  %v965 = vpop.f32.mrf.mxu0
  %v966 = vadd.f32 0.0, %v965
  %v967 = vpop.f32.mrf.mxu0
  %v968 = vpop.f32.mrf.mxu0
  %v969 = vadd.f32 0.0, %v968
  %v970 = vpop.f32.mrf.mxu0
  %971 = vmatprep.mubr.bf16.mxu0 0
  %972 = vmatmul.mubr.bf16.gmra.mxu0 %v866
  %v973 = vpop.f32.mrf.mxu0
  %v974 = vadd.f32 0.0, %v973
  %v975 = vpop.f32.mrf.mxu0
  %v976 = vpop.f32.mrf.mxu0
  %v977 = vadd.f32 0.0, %v976
  %v978 = vpop.f32.mrf.mxu0
  %979 = vdwg.mxu0
  %v980 = vld [vmem:[%s7] sm:$0xff]
  %v981 = vld [vmem:[%s7 + $0x8] sm:$0xff]
  %v982 = vld [vmem:[%s7 + $0x10] sm:$0xff]
  %v983 = vld [vmem:[%s7 + $0x18] sm:$0xff]
  %985 = vset.pattern.permute.xlu0 0
  %986 = vperm.xlu0 %985, %v980
  %v987 = vpop.permute.xlu0 %986
  %990 = vset.pattern.permute.xlu0 0
  %991 = vperm.xlu0 %990, %v981
  %v992 = vpop.permute.xlu0 %991
  %995 = vset.pattern.permute.xlu0 0
  %996 = vperm.xlu0 %995, %v982
  %v997 = vpop.permute.xlu0 %996
  %1000 = vset.pattern.permute.xlu0 0
  %1001 = vperm.xlu0 %1000, %v983
  %v1002 = vpop.permute.xlu0 %1001
  %v1004 = vmul.f32 %v966, %v987
  %v1005 = vmul.f32 %v969, %v992
  %v1006 = vmul.f32 %v974, %v997
  %v1007 = vmul.f32 %v977, %v1002
  %v1008 = vld [vmem:[%s8] sm:$0xff]
  %v1009 = vld [vmem:[%s8 + $0x8] sm:$0xff]
  %v1010 = vld [vmem:[%s8 + $0x10] sm:$0xff]
  %v1011 = vld [vmem:[%s8 + $0x18] sm:$0xff]
  %1013 = vset.pattern.permute.xlu0 0
  %1014 = vperm.xlu0 %1013, %v1008
  %v1015 = vpop.permute.xlu0 %1014
  %1018 = vset.pattern.permute.xlu0 0
  %1019 = vperm.xlu0 %1018, %v1009
  %v1020 = vpop.permute.xlu0 %1019
  %1023 = vset.pattern.permute.xlu0 0
  %1024 = vperm.xlu0 %1023, %v1010
  %v1025 = vpop.permute.xlu0 %1024
  %1028 = vset.pattern.permute.xlu0 0
  %1029 = vperm.xlu0 %1028, %v1011
  %v1030 = vpop.permute.xlu0 %1029
  %v1032 = vadd.f32 %v1004, %v1015
  %v1033 = vadd.f32 %v1005, %v1020
  %v1034 = vadd.f32 %v1006, %v1025
  %v1035 = vadd.f32 %v1007, %v1030
  %v1036 = vld [vmem:[%s9] sm:$0xff]
  %v1037 = vld [vmem:[%s10] sm:$0xff]
  %v1039 = vsel %vm634, %v1036, 0
  %1041 = vmatprep.subr.mxu0 0.0
  %1042 = vmatpush1.msra.mxu0 0.0
  %1043 = vmatprep.subr.mxu0 0.0
  %1044 = vmatpush1.msra.mxu0 0.0
  %1045 = vmatprep.subr.mxu0 0.0
  %1046 = vmatpush1.msra.mxu0 0.0
  %1047 = vmatprep.subr.mxu0 0.0
  %1048 = vmatpush1.msra.mxu0 0.0
  %1049 = vmatprep.subr.mxu0 0.0
  %1050 = vmatpush1.msra.mxu0 0.0
  %1051 = vmatprep.subr.mxu0 0.0
  %1052 = vmatpush1.msra.mxu0 0.0
  %1053 = vmatprep.subr.mxu0 0.0
  %1054 = vmatpush1.msra.mxu0 0.0
  %1055 = vmatprep.subr.mxu0 0.0
  %1056 = vmatpush1.msra.mxu0 0.0
  %1057 = vmatprep.subr.mxu0 0.0
  %1058 = vmatpush1.msra.mxu0 0.0
  %1059 = vmatprep.subr.mxu0 0.0
  %1060 = vmatpush1.msra.mxu0 0.0
  %1061 = vmatprep.subr.mxu0 0.0
  %1062 = vmatpush1.msra.mxu0 0.0
  %1063 = vmatprep.subr.mxu0 0.0
  %1064 = vmatpush1.msra.mxu0 0.0
  %1065 = vmatprep.subr.mxu0 0.0
  %1066 = vmatpush1.msra.mxu0 %v1035
  %1067 = vmatprep.subr.mxu0 0.0
  %1068 = vmatpush1.msra.mxu0 %v1034
  %1069 = vmatprep.subr.mxu0 0.0
  %1070 = vmatpush1.msra.mxu0 %v1033
  %1071 = vmatprep.subr.mxu0 0.0
  %1072 = vmatpush1.msra.mxu0 %v1032
  %1073 = vmatprep.subr.mxu0 0.0
  %1074 = vmatpush2.msra.mxu0 0.0
  %1075 = vmatprep.subr.mxu0 0.0
  %1076 = vmatpush2.msra.mxu0 0.0
  %1077 = vmatprep.subr.mxu0 0.0
  %1078 = vmatpush2.msra.mxu0 0.0
  %1079 = vmatprep.subr.mxu0 0.0
  %1080 = vmatpush2.msra.mxu0 0.0
  %1081 = vmatprep.subr.mxu0 0.0
  %1082 = vmatpush2.msra.mxu0 0.0
  %1083 = vmatprep.subr.mxu0 0.0
  %1084 = vmatpush2.msra.mxu0 0.0
  %1085 = vmatprep.subr.mxu0 0.0
  %1086 = vmatpush2.msra.mxu0 0.0
  %1087 = vmatprep.subr.mxu0 0.0
  %1088 = vmatpush2.msra.mxu0 0.0
  %1089 = vmatprep.subr.mxu0 0.0
  %1090 = vmatpush2.msra.mxu0 0.0
  %1091 = vmatprep.subr.mxu0 0.0
  %1092 = vmatpush2.msra.mxu0 0.0
  %1093 = vmatprep.subr.mxu0 0.0
  %1094 = vmatpush2.msra.mxu0 0.0
  %1095 = vmatprep.subr.mxu0 0.0
  %1096 = vmatpush2.msra.mxu0 0.0
  %1097 = vmatprep.subr.mxu0 0.0
  %1098 = vmatpush2.msra.mxu0 0.0
  %1099 = vmatprep.subr.mxu0 0.0
  %1100 = vmatpush2.msra.mxu0 0.0
  %1101 = vmatprep.subr.mxu0 0.0
  %1102 = vmatpush2.msra.mxu0 0.0
  %1103 = vmatprep.subr.mxu0 0.0
  %1104 = vmatpush2.msra.mxu0 0.0
  %1105 = vmatprep.mubr.f32.mxu0 0.0
  %1106 = vmatmul.mubr.f32.gmra.mxu0 %v1039
  %v1107 = vpop.f32.mrf.mxu0
  %v1108 = vadd.f32 %v1037, %v1107
  %v1109 = vpop.f32.mrf.mxu0
  %1110 = vdwg.mxu0
  %vm1111 = vcmask 15360
  %1112 = vst.msk [vmem:[%s11] sm:$0xff] %vm1111, %v1108
  // Predicated region
  $region76: #{cheb_encoder_forward.1} parent=0 // pred_check
    _
  $region77: #{cheb_encoder_forward.1} parent=0 // pred_check_branch
    %1114 = sbr.rel (0) target = $region79
  $region78: #{cheb_encoder_forward.1} parent=0 // pred_region
    _
  $region79: #{cheb_encoder_forward.1} parent=0 // pred_fallthru
    _
  // Predicated region
  $region80: #{cheb_encoder_forward.1} parent=0 // pred_check
    _
  $region81: #{cheb_encoder_forward.1} parent=0 // pred_check_branch
    %1116 = sbr.rel (0) target = $region83
  $region82: #{cheb_encoder_forward.1} parent=0 // pred_region
    _
  $region83: #{cheb_encoder_forward.1} parent=0 // pred_fallthru
    _
  %1117 = vsyncmov [#allocation3]
  %s1118 = vpop.sfrf %1117
  %p1119 = scmp.eq.s32.totalorder %s1118, 0
  %p1120 = pneg %p1119
  %1122 = shalt.err (%p1120)

</llo_original>
